<compile_context>
chip_gen: v5e
topology: v5e:2x2
jax: 0.10.0
libtpu: 0.0.40
codegen_flags: <defaults>
</compile_context>

<pallas_src>
import random

import jax
import jax.numpy as jnp
from jax.experimental import pallas as pl
from jax.experimental.pallas import tpu as pltpu


def _op_kernel(sel_ref, w_ref, adj_ref, x_ref, o_ref, acc_ref):
    """Grid = (row tiles m, selected ops i, contraction slabs kk).

    acc[m] += (w[i] / num) * A[sel[i]][m-tile, kk-slab] @ x[kk-slab]
    (bf16 operands, f32 MXU accumulation).
    """
    i = pl.program_id(1)     # selected-op index     (reduction axis)
    kk = pl.program_id(2)    # contraction-slab idx  (reduction axis)

    @pl.when(jnp.logical_and(i == 0, kk == 0))
    def _():
        acc_ref[...] = jnp.zeros_like(acc_ref)

    tk = adj_ref.shape[2]
    if x_ref.shape[0] == tk:
        # Either x is streamed per contraction slab, or tk == N: block == slab.
        x_blk = x_ref[...]
    else:
        # x fully VMEM-resident: slice out the current contraction slab.
        x_blk = x_ref[pl.ds(pl.multiple_of(kk * tk, tk), tk), :]

    w = w_ref[i]  # scalar weight from SMEM, already divided by num on the host
    acc_ref[...] += w * jnp.dot(
        adj_ref[0], x_blk, preferred_element_type=jnp.float32
    )

    @pl.when(
        jnp.logical_and(
            i == pl.num_programs(1) - 1, kk == pl.num_programs(2) - 1
        )
    )
    def _():
        o_ref[...] = acc_ref[...].astype(o_ref.dtype)


def _choose_tiles(N, bytes_per_el, adj_budget_bytes=8 * 1024 * 1024):
    """Pick (tm, tk).

    tm: moderate (<=512) and with >= 2 row tiles where possible so both v7x
        TensorCores get work (the result tile stays one (tm, 128) f32 slab).
    tk: as large as possible -- ideally the full contraction N (longest
        contiguous DMA burst, fewest ~0.35us grid steps) -- subject to a
        double-buffered adjacency-tile VMEM budget.
    """
    tm = N
    for cand in (512, 384, 256, 192, 128, 64, 32, 16, 8):
        if N % cand == 0 and N // cand >= 2:
            tm = cand
            break
    if 2 * tm * N * bytes_per_el <= adj_budget_bytes:
        return tm, N
    for cand in (8192, 4096, 2048, 1024, 512, 256, 128):
        if N % cand == 0 and 2 * tm * cand * bytes_per_el <= adj_budget_bytes:
            return tm, cand
    return tm, N  # no 128-multiple divisor fits the budget: take full rows


def prepare_adjacencies(adjs, compute_dtype=jnp.bfloat16):
    """One-time (model-init) conversion of the dense adjacency stack to the
    MXU compute dtype.  Hoisted out of the forward pass so no per-call cast of
    the full (num_op, N, N) stack ever happens."""
    return adjs.astype(compute_dtype)


def op_forward(x, adjs, ws, k, seed=0, compute_dtype=jnp.bfloat16,
               tm=None, tk=None):
    """Pallas equivalent of Op(k).forward(x, adjs, ws).

    x:    (N, D)          float32
    adjs: (num_op, N, N)  dense adjacency stack, ideally already in
                          `compute_dtype` (see prepare_adjacencies)
    ws:   (num_op,)       float32
    seed: per-call RNG seed for the random operator subset; vary it per step
          to reproduce the module's fresh-sample-per-forward behaviour.
    """
    num_op = adjs.shape[0]
    num = int(num_op // k)
    if num < 1:
        raise ValueError(f"k={k} too large for num_op={num_op}: num_op//k < 1")

    # Host-side random subset selection (matches random.sample in the module).
    idx = sorted(random.Random(seed).sample(range(num_op), num))
    sel = jnp.asarray(idx, dtype=jnp.int32)                          # (num,)
    # Fold the 1/num normalization into the weights (no final rescale pass).
    w_sel = (jnp.take(ws, sel, axis=0) / float(num)).astype(jnp.float32)

    N, D = x.shape
    assert adjs.shape == (num_op, N, N)

    if adjs.dtype == compute_dtype:
        adj_stack = adjs            # no per-call cast -- hoisted to model init
        sel_kernel = sel
    else:
        # Fallback: cast ONLY the selected subset, never the full stack.
        adj_stack = jnp.take(adjs, sel, axis=0).astype(compute_dtype)
        sel_kernel = jnp.arange(num, dtype=jnp.int32)

    bpe = jnp.dtype(compute_dtype).itemsize
    if tm is None or tk is None:
        auto_tm, auto_tk = _choose_tiles(N, bpe)
        tm = auto_tm if tm is None else tm
        tk = auto_tk if tk is None else tk
    assert N % tm == 0 and N % tk == 0

    # Lane-dense feature dimension: pad D up to a multiple of 128 (unmasked
    # vst); no further padding -- the kernel is bandwidth-bound.
    Dp = max(128, ((D + 127) // 128) * 128)
    x_p = jnp.zeros((N, Dp), compute_dtype).at[:, :D].set(
        x.astype(compute_dtype))

    # x residency: hold all of x in VMEM (constant index_map -> fetched once)
    # unless it would not fit a conservative budget; then stream tk-slabs.
    x_resident = 2 * N * Dp * bpe <= 16 * 1024 * 1024
    if x_resident:
        x_spec = pl.BlockSpec((N, Dp), lambda m, i, kk, sel_r, w_r: (0, 0))
    else:
        # TODO(synk): for huge N, reorder the grid to (m, kk, i) so streamed x
        # slabs are not re-fetched once per selected op.
        x_spec = pl.BlockSpec((tk, Dp), lambda m, i, kk, sel_r, w_r: (kk, 0))

    grid = (N // tm, num, N // tk)

    grid_spec = pltpu.PrefetchScalarGridSpec(
        num_scalar_prefetch=2,   # sel (used by index_map), w_sel (kernel body)
        grid=grid,
        in_specs=[
            # Indexed DMA straight out of the adjacency stack: the random
            # subset is selected via the prefetched sel vector, no host gather.
            pl.BlockSpec((1, tm, tk),
                         lambda m, i, kk, sel_r, w_r: (sel_r[i], m, kk)),
            x_spec,
        ],
        out_specs=pl.BlockSpec((tm, Dp),
                               lambda m, i, kk, sel_r, w_r: (m, 0)),
        scratch_shapes=[pltpu.VMEM((tm, Dp), jnp.float32)],
    )

    # VMEM budget: double-buffered adjacency tiles + x + output + accumulator,
    # clamped to stay inside v7x's 64 MiB physical VMEM with headroom.
    out_bpe = jnp.dtype(x.dtype).itemsize
    vmem_est = (2 * tm * tk * bpe                              # adjacency
                + 2 * (N if x_resident else tk) * Dp * bpe     # x
                + 2 * tm * Dp * out_bpe                        # output
                + tm * Dp * 4)                                 # f32 accumulator
    vmem_limit = int(min(max(2 * vmem_est, 16 * 1024 * 1024),
                         48 * 1024 * 1024))

    out_p = pl.pallas_call(
        _op_kernel,
        out_shape=jax.ShapeDtypeStruct((N, Dp), x.dtype),
        grid_spec=grid_spec,
        compiler_params=pltpu.CompilerParams(
            # rows parallel (megacore on v7x); op & contraction are reductions
            dimension_semantics=("parallel", "arbitrary", "arbitrary"),
            vmem_limit_bytes=vmem_limit,
        ),
    )(sel_kernel, w_sel, adj_stack, x_p)

    return out_p[:, :D]


def op_forward_ref(x, adjs, ws, k, seed=0, compute_dtype=jnp.bfloat16):
    """Plain-JAX reference with the same deterministic selection and the same
    bf16-input / f32-accumulation numerics as the kernel."""
    num_op = adjs.shape[0]
    num = int(num_op // k)
    idx = sorted(random.Random(seed).sample(range(num_op), num))
    xc = x.astype(compute_dtype).astype(jnp.float32)
    acc = jnp.zeros_like(x, dtype=jnp.float32)
    for i in idx:
        a = adjs[i].astype(compute_dtype).astype(jnp.float32)
        acc = acc + ws[i] * (a @ xc)
    return (acc / num).astype(x.dtype)


if __name__ == "__main__":
    key = jax.random.PRNGKey(0)
    k_op = 2          # Op(k=2)
    num_op = 4        # number of (adj, w) pairs -> num = 4 // 2 = 2 selected
    N, D = 384, 32    # 384 -> tm=192 (2 row tiles), tk=N=384; D padded to 128

    kx, ka, kw, km = jax.random.split(key, 4)
    x = jax.random.normal(kx, (N, D), dtype=jnp.float32)

    # Deterministic "sparse" adjacencies stored dense: random values ~80% zeroed.
    vals = jax.random.normal(ka, (num_op, N, N), dtype=jnp.float32)
    mask = (jax.random.uniform(km, (num_op, N, N)) < 0.2).astype(jnp.float32)
    adjs_f32 = vals * mask
    ws = jax.random.uniform(kw, (num_op,), dtype=jnp.float32)

    # One-time (model init) bf16 conversion -- the forward pass never casts the
    # full adjacency stack again.
    adjs = prepare_adjacencies(adjs_f32, jnp.bfloat16)

    out = op_forward(x, adjs, ws, k_op, seed=0)
    out = jax.block_until_ready(out)

    ref = op_forward_ref(x, adjs_f32, ws, k_op, seed=0)
    assert out.shape == (N, D)
    assert jnp.allclose(out, ref, atol=2e-3, rtol=2e-3), "mismatch vs reference"

    print("KERNEL_OK")
</pallas_src>

<mosaic_0001>
module attributes {stable_mosaic.version = 11 : i64} {
  func.func @_op_kernel(%arg0: i32, %arg1: i32, %arg2: i32, %arg3: memref<2xi32, #tpu.memory_space<smem>>, %arg4: memref<2xf32, #tpu.memory_space<smem>>, %arg5: memref<1x192x384xbf16, #tpu.memory_space<vmem>>, %arg6: memref<384x128xbf16, #tpu.memory_space<vmem>>, %arg7: memref<192x128xf32, #tpu.memory_space<vmem>>, %arg8: memref<192x128xf32, #tpu.memory_space<vmem>>) attributes {dimension_semantics = [#tpu.dimension_semantics<parallel>, #tpu.dimension_semantics<arbitrary>, #tpu.dimension_semantics<arbitrary>], iteration_bounds = array<i64: 2, 2, 1>, scalar_prefetch = 2 : i64, scratch_operands = 1 : i64, tpu.core_type = #tpu.core_type<tc>, window_params = [{transform_indices = @transform_0, window_bounds = array<i64: 1, 192, 384>}, {pipeline_mode = #tpu.pipeline_mode<synchronous>, transform_indices = @transform_1, window_bounds = array<i64: 384, 128>}, {transform_indices = @transform_2, window_bounds = array<i64: 192, 128>}]} {
    %c0_i32 = arith.constant 0 : i32
    %0 = arith.cmpi eq, %arg1, %c0_i32 : i32
    %c0_i32_0 = arith.constant 0 : i32
    %1 = arith.cmpi eq, %arg2, %c0_i32_0 : i32
    %2 = arith.andi %0, %1 : i1
    %3 = arith.extui %2 : i1 to i32
    %c0_i32_1 = arith.constant 0 : i32
    %4 = arith.cmpi ne, %3, %c0_i32_1 : i32
    scf.if %4 {
      %cst_12 = arith.constant 0.000000e+00 : f32
      %21 = vector.broadcast %cst_12 : f32 to vector<192x128xf32>
      %c0_13 = arith.constant 0 : index
      %c0_14 = arith.constant 0 : index
      %22 = vector.load %arg8[%c0_13, %c0_14] : memref<192x128xf32, #tpu.memory_space<vmem>>, vector<192x128xf32>
      tpu.vector_store %arg8[%c0_13, %c0_14], %21 {strides = array<i32>} : memref<192x128xf32, #tpu.memory_space<vmem>>, vector<192x128xf32>,
    } else {
    }
    %c0 = arith.constant 0 : index
    %c0_2 = arith.constant 0 : index
    %5 = vector.load %arg6[%c0, %c0_2] : memref<384x128xbf16, #tpu.memory_space<vmem>>, vector<384x128xbf16>
    %6 = arith.index_cast %arg1 : i32 to index
    %7 = memref.load %arg4[%6] : memref<2xf32, #tpu.memory_space<smem>>
    %c0_3 = arith.constant 0 : index
    %c0_4 = arith.constant 0 : index
    %8 = vector.load %arg8[%c0_3, %c0_4] : memref<192x128xf32, #tpu.memory_space<vmem>>, vector<192x128xf32>
    %c0_5 = arith.constant 0 : index
    %c0_6 = arith.constant 0 : index
    %c0_7 = arith.constant 0 : index
    %9 = vector.load %arg5[%c0_5, %c0_6, %c0_7] : memref<1x192x384xbf16, #tpu.memory_space<vmem>>, vector<1x192x384xbf16>
    %10 = vector.shape_cast %9 : vector<1x192x384xbf16> to vector<192x384xbf16>
    %cst = arith.constant dense<0.000000e+00> : vector<192x128xf32>
    %11 = tpu.matmul %10, %5, %cst {dimension_numbers = #tpu.dot_dimension_numbers<[1], [0], [0], [1], [0, 0, 1, 1], [], []>} : vector<192x384xbf16>, vector<384x128xbf16>, vector<192x128xf32> -> vector<192x128xf32>
    %12 = vector.broadcast %7 : f32 to vector<192x128xf32>
    %13 = arith.mulf %12, %11 : vector<192x128xf32>
    %14 = arith.addf %8, %13 : vector<192x128xf32>
    %c0_8 = arith.constant 0 : index
    %c0_9 = arith.constant 0 : index
    %15 = vector.load %arg8[%c0_8, %c0_9] : memref<192x128xf32, #tpu.memory_space<vmem>>, vector<192x128xf32>
    tpu.vector_store %arg8[%c0_8, %c0_9], %14 {strides = array<i32>} : memref<192x128xf32, #tpu.memory_space<vmem>>, vector<192x128xf32>,
    %c1_i32 = arith.constant 1 : i32
    %16 = arith.cmpi eq, %arg1, %c1_i32 : i32
    %c0_i32_10 = arith.constant 0 : i32
    %17 = arith.cmpi eq, %arg2, %c0_i32_10 : i32
    %18 = arith.andi %16, %17 : i1
    %19 = arith.extui %18 : i1 to i32
    %c0_i32_11 = arith.constant 0 : i32
    %20 = arith.cmpi ne, %19, %c0_i32_11 : i32
    scf.if %20 {
      %c0_12 = arith.constant 0 : index
      %c0_13 = arith.constant 0 : index
      %21 = vector.load %arg8[%c0_12, %c0_13] : memref<192x128xf32, #tpu.memory_space<vmem>>, vector<192x128xf32>
      %c0_14 = arith.constant 0 : index
      %c0_15 = arith.constant 0 : index
      %22 = vector.load %arg7[%c0_14, %c0_15] : memref<192x128xf32, #tpu.memory_space<vmem>>, vector<192x128xf32>
      tpu.vector_store %arg7[%c0_14, %c0_15], %21 {strides = array<i32>} : memref<192x128xf32, #tpu.memory_space<vmem>>, vector<192x128xf32>,
    } else {
    }
    return
  }
  func.func @transform_0(%arg0: i32, %arg1: i32, %arg2: i32, %arg3: memref<2xi32, #tpu.memory_space<smem>>, %arg4: memref<2xf32, #tpu.memory_space<smem>>) -> (i32, i32, i32) {
    %0 = arith.index_cast %arg1 : i32 to index
    %1 = memref.load %arg3[%0] : memref<2xi32, #tpu.memory_space<smem>>
    %c0_i32 = arith.constant 0 : i32
    return %1, %arg0, %arg2 : i32, i32, i32
  }
  func.func @transform_1(%arg0: i32, %arg1: i32, %arg2: i32, %arg3: memref<2xi32, #tpu.memory_space<smem>>, %arg4: memref<2xf32, #tpu.memory_space<smem>>) -> (i32, i32) {
    %c0_i32 = arith.constant 0 : i32
    %c0_i32_0 = arith.constant 0 : i32
    %c0_i32_1 = arith.constant 0 : i32
    return %c0_i32, %c0_i32_0 : i32, i32
  }
  func.func @transform_2(%arg0: i32, %arg1: i32, %arg2: i32, %arg3: memref<2xi32, #tpu.memory_space<smem>>, %arg4: memref<2xf32, #tpu.memory_space<smem>>) -> (i32, i32) {
    %c0_i32 = arith.constant 0 : i32
    %c0_i32_0 = arith.constant 0 : i32
    return %arg0, %c0_i32 : i32, i32
  }
}

</mosaic_0001>

<llo_original>
// kernel: tpu_custom_call.1
$region0: #{tpu_custom_call.1}
  #allocation0 [shape = 'u32[]', space=smem, size = 0x4, offset = 0x4, fixed_abs, tag = 'smem constant byte address 0x4 - core index']
  #allocation1 [shape = 'u32[72,128]{1,0:T(1,128)}', space=vmem, size = 0x9000, scoped, tag = 'internal scratch']
  #allocation2 [shape = 'f32[192,128]{1,0:T(8,128)}', space=vmem, size = 0x18000, scoped, tag = 'scratch operand']
  #allocation3 [shape = 's32[1]{0}', space=sflag, size = 0x4, scoped, tag = 'scoped memory for tpu_custom_call.1']
  #allocation4 [shape = 'u8[512]{0}', space=smem, size = 0x200, scoped, tag = 'prefetched SMEM operand 0']
  #allocation5 [shape = 'u8[512]{0}', space=smem, size = 0x200, scoped, tag = 'prefetched SMEM operand 1']
  %s0 = inlined_call_operand.hbm [shape: s32[2], index: 0, kind: input, shape index: {}]
  %s1 = inlined_call_operand.hbm [shape: f32[2], index: 1, kind: input, shape index: {}]
  %s2 = inlined_call_operand.hbm [shape: bf16[4,384,384], index: 2, kind: input, shape index: {}]
  %s3 = inlined_call_operand.hbm [shape: bf16[384,128], index: 3, kind: input, shape index: {}]
  %s4 = inlined_call_operand.hbm [shape: f32[384,128], index: 4, kind: output, shape index: {}]
  %s5 = sld [smem:[#allocation0]]
  $region57: #{tpu_custom_call.1} parent=0
    _
  %s7 = ssub.s32 1, %s5
  %s8 = scalar_select 0, %s7, %s5
  %s10 = sshll.u32 %s0, 4
  %s11 = int_to_ptr.hbm [resolvable:$true] %s10
  %13 = dma.hbm_to_smem %s11, 16, [#allocation4], [#allocation3]
  %s15 = sshll.u32 %s1, 4
  %s16 = int_to_ptr.hbm [resolvable:$true] %s15
  %18 = dma.hbm_to_smem %s16, 16, [#allocation5], [#allocation3]
  %20 = dma.done [#allocation3], 32
  %21 = sfence
  $region1: #{tpu_custom_call.1} parent=0
    #allocation6 [shape = 'u8[294912]{0}', space=vmem, size = 0x48000, scoped, tag = 'input window, operand 2']
    #allocation7 [shape = 's32[2]{0}', space=sflag, size = 0x8, scoped, tag = 'scoped memory for tpu_custom_call.1']
    #allocation8 [shape = 's32[2]{0}', space=sflag, size = 0x8, scoped, tag = 'scoped memory for tpu_custom_call.1']
    #allocation9 [shape = 'u8[98304]{0}', space=vmem, size = 0x18000, scoped, tag = 'input window, operand 3, single buffered']
    #allocation10 [shape = 's32[1]{0}', space=sflag, size = 0x4, scoped, tag = 'scoped memory for tpu_custom_call.1']
    #allocation11 [shape = 'u8[196608]{0}', space=vmem, size = 0x30000, scoped, tag = 'output window, operand 0']
    %22 = vsyncpa [#allocation7], 0
    %s23 = scalar_lea.sflag [#allocation7], 1
    %24 = vsyncpa %s23, 0
    %25 = vsyncpa [#allocation10], 0
    %26 = vsyncpa [#allocation8], 0
    %s27 = scalar_lea.sflag [#allocation8], 1
    %28 = vsyncpa %s27, 0
    loop: start=0, step=1, limit=6
    $region2: #{tpu_custom_call.1} parent=1 // loop_pre_header
      _
    $region3: #{tpu_custom_call.1} parent=1 // loop_header
      %s30 = sphi 0, %s34
      %p31 = scmp.ge.s32.totalorder %s30, 6
      %s37 = sphi 0, %s56
      %s38 = sphi 0, %s52
      %s39 = sphi 0, %s48
      %s40 = sphi 0, %s37
      %s41 = sphi 0, %s38
      %s42 = sphi 0, %s39
      %s43 = sphi 0, %s40
      %s44 = sphi 0, %s41
      %s45 = sphi 0, %s42
      %s65 = sphi 0, %s67
      %s68 = sphi 0, %s65
      %s69 = sphi 0, %s68
      %s85 = sphi 0, %s69
      %s89 = sphi 0, %s89
      %s91 = sphi 0, %s89
      %s92 = sphi 0, %s91
      %s106 = sphi 0, %s92
      %s112 = sphi 0, %s114
      %s115 = sphi 0, %s112
      %s116 = sphi 0, %s115
      %s132 = sphi 0, %s116
    $region4: #{tpu_custom_call.1} parent=1 // loop_header_branch
      %33 = sbr.rel (%p31) target = $region8
    $region5: #{tpu_custom_call.1} parent=1 // loop_body
      %s35 = ssub.s32 %s30, 1
      %s36 = ssub.s32 %s30, 2
      %s46 = sadd.s32 1, %s39
      %p47 = scmp.ge.s32.totalorder %s46, 1
      %s48 = scalar_select %p47, 0, %s46
      %s49 = sadd.s32 1, %s38
      %s50 = scalar_select %p47, %s49, %s38
      %p51 = scmp.ge.s32.totalorder %s50, 2
      %s52 = scalar_select %p51, 0, %s50
      %s53 = sadd.s32 1, %s37
      %s54 = scalar_select %p51, %s53, %s37
      %p55 = scmp.ge.s32.totalorder %s54, 2
      %s56 = scalar_select %p55, 0, %s54
      %s57 = sld [smem:[#allocation4 + %s38]]
      %s58 = sld [smem:[#allocation4 + %s52]]
      %s59 = ssub.s32 %s57, %s58
      %s60 = ssub.s32 %s37, %s56
      %s61 = sor.u32 %s59, %s60
      %s62 = ssub.s32 %s39, %s48
      %s63 = sor.u32 %s61, %s62
      %p64 = scmp.eq.s32.totalorder %s63, 0
      %s66 = sadd.s32 %s65, 1
      %s67 = scalar_select %p64, %s65, %s66
      %p70 = pneg %p64
      %p71 = scmp.eq.s32.totalorder %s30, 3
      %p72 = por %p70, %p71
      %p73 = scmp.ne.s32.totalorder %s65, %s68
      %p74 = scmp.eq.s32.totalorder %s30, 0
      %p75 = por %p73, %p74
      %p76 = scmp.ne.s32.totalorder %s65, %s68
      %p77 = scmp.eq.s32.totalorder %s35, 3
      %p78 = por %p76, %p77
      %p79 = scmp.ne.s32.totalorder %s68, %s69
      %p80 = scmp.eq.s32.totalorder %s35, 0
      %p81 = por %p79, %p80
      %p82 = scmp.ne.s32.totalorder %s68, %s69
      %p83 = scmp.eq.s32.totalorder %s36, 3
      %p84 = por %p82, %p83
      %p86 = scmp.ne.s32.totalorder %s69, %s85
      %p87 = scmp.eq.s32.totalorder %s36, 0
      %p88 = por %p86, %p87
      %s90 = sadd.s32 %s89, 1
      %p93 = scmp.eq.s32.totalorder %s30, 3
      %p94 = scmp.ne.s32.totalorder %s89, %s91
      %p95 = scmp.eq.s32.totalorder %s30, 0
      %p96 = por %p94, %p95
      %p97 = scmp.ne.s32.totalorder %s89, %s91
      %p98 = scmp.eq.s32.totalorder %s35, 3
      %p99 = por %p97, %p98
      %p100 = scmp.ne.s32.totalorder %s91, %s92
      %p101 = scmp.eq.s32.totalorder %s35, 0
      %p102 = por %p100, %p101
      %p103 = scmp.ne.s32.totalorder %s91, %s92
      %p104 = scmp.eq.s32.totalorder %s36, 3
      %p105 = por %p103, %p104
      %p107 = scmp.ne.s32.totalorder %s92, %s106
      %p108 = scmp.eq.s32.totalorder %s36, 0
      %p109 = por %p107, %p108
      %s110 = ssub.s32 %s37, %s56
      %p111 = scmp.eq.s32.totalorder %s110, 0
      %s113 = sadd.s32 %s112, 1
      %s114 = scalar_select %p111, %s112, %s113
      %p117 = pneg %p111
      %p118 = scmp.eq.s32.totalorder %s30, 3
      %p119 = por %p117, %p118
      %p120 = scmp.ne.s32.totalorder %s112, %s115
      %p121 = scmp.eq.s32.totalorder %s30, 0
      %p122 = por %p120, %p121
      %p123 = scmp.ne.s32.totalorder %s112, %s115
      %p124 = scmp.eq.s32.totalorder %s35, 3
      %p125 = por %p123, %p124
      %p126 = scmp.ne.s32.totalorder %s115, %s116
      %p127 = scmp.eq.s32.totalorder %s35, 0
      %p128 = por %p126, %p127
      %p129 = scmp.ne.s32.totalorder %s115, %s116
      %p130 = scmp.eq.s32.totalorder %s36, 3
      %p131 = por %p129, %p130
      %p133 = scmp.ne.s32.totalorder %s116, %s132
      %p134 = scmp.eq.s32.totalorder %s36, 0
      %p135 = por %p133, %p134
      %p136 = scmp.le.s32.totalorder 1, %s30
      %p137 = scmp.lt.s32.totalorder %s30, 5
      %p138 = pnand %p136, %p137
      %p139 = pneg %p138
      // Predicated region
      $region9: #{tpu_custom_call.1} parent=5 // pred_check
        _
      $region10: #{tpu_custom_call.1} parent=5 // pred_check_branch
        %141 = sbr.rel (%p138) target = $region12
      $region11: #{tpu_custom_call.1} parent=5 // pred_region
        %s142 = ssub.s32 %s30, 1
        // Predicated region
        $region13: #{tpu_custom_call.1} parent=11 // pred_check
          %p143 = pneg %p102
        $region14: #{tpu_custom_call.1} parent=11 // pred_check_branch
          %145 = sbr.rel (%p143) target = $region16
        $region15: #{tpu_custom_call.1} parent=11 // pred_region
          %147 = vsyncadd [#allocation10], 0
          %s148 = sshll.u32 %s3, 4
          %s149 = int_to_ptr.hbm [resolvable:$true] %s148
          %s150 = sshll.u32 [#allocation9], 4
          %s151 = int_to_ptr.vmem [resolvable:$true] %s150
          %156 = dma.hbm_to_vmem [thread:$0]  %s149, 3072, %s151, [#allocation10], 64, 64, 4
        $region16: #{tpu_custom_call.1} parent=11 // pred_fallthru
          _
      $region12: #{tpu_custom_call.1} parent=5 // pred_fallthru
        _
      %p157 = scmp.lt.s32.totalorder %s30, 4
      // Predicated region
      $region17: #{tpu_custom_call.1} parent=5 // pred_check
        %p158 = pneg %p157
      $region18: #{tpu_custom_call.1} parent=5 // pred_check_branch
        %160 = sbr.rel (%p158) target = $region20
      $region19: #{tpu_custom_call.1} parent=5 // pred_region
        // Predicated region
        $region21: #{tpu_custom_call.1} parent=19 // pred_check
          %p161 = pneg %p75
        $region22: #{tpu_custom_call.1} parent=19 // pred_check_branch
          %163 = sbr.rel (%p161) target = $region24
        $region23: #{tpu_custom_call.1} parent=19 // pred_region
          %s164 = sand.u32 %s65, 1
          %s165 = scalar_lea.sflag [#allocation7], %s164
          %s166 = sand.u32 %s65, 1
          %s167 = smul.addr %s166, 288
          %s168 = scalar_lea.vmem [#allocation6], %s167
          %s169 = sld [smem:[#allocation4 + %s38]]
          %s170 = smul.u32 24, %s37
          %s171 = smul.u32 3, %s39
          %173 = vsyncadd %s165, 0
          %s174 = smul.addr %s170, 3
          %s175 = sadd.s32 %s171, %s174
          %s176 = smul.addr %s169, 144
          %s177 = sadd.s32 %s175, %s176
          %s178 = smul.addr %s177, 4
          %s179 = scalar_lea.hbm %s2, %s178
          %s180 = sshll.u32 %s179, 4
          %s181 = int_to_ptr.hbm [resolvable:$true] %s180
          %s182 = sshll.u32 %s168, 4
          %s183 = int_to_ptr.vmem [resolvable:$true] %s182
          %188 = dma.hbm_to_vmem [thread:$0]  %s181, 4608, %s183, %s165, 192, 192, 12
        $region24: #{tpu_custom_call.1} parent=19 // pred_fallthru
          _
      $region20: #{tpu_custom_call.1} parent=5 // pred_fallthru
        _
      %p189 = scmp.le.s32.totalorder 1, %s30
      %p190 = scmp.lt.s32.totalorder %s30, 5
      %p191 = pnand %p189, %p190
      %p192 = pneg %p191
      // Predicated region
      $region25: #{tpu_custom_call.1} parent=5 // pred_check
        _
      $region26: #{tpu_custom_call.1} parent=5 // pred_check_branch
        %194 = sbr.rel (%p191) target = $region28
      $region27: #{tpu_custom_call.1} parent=5 // pred_region
        %s195 = ssub.s32 %s30, 1
        %s196 = sand.u32 %s68, 1
        %s197 = scalar_lea.sflag [#allocation7], %s196
        %s198 = sand.u32 %s68, 1
        %s199 = smul.addr %s198, 288
        %s200 = scalar_lea.vmem [#allocation6], %s199
        // Predicated region
        $region29: #{tpu_custom_call.1} parent=27 // pred_check
          %p201 = pneg %p81
        $region30: #{tpu_custom_call.1} parent=27 // pred_check_branch
          %203 = sbr.rel (%p201) target = $region32
        $region31: #{tpu_custom_call.1} parent=27 // pred_region
          %205 = dma.done %s197, 4608
        $region32: #{tpu_custom_call.1} parent=27 // pred_fallthru
          _
        // Predicated region
        $region33: #{tpu_custom_call.1} parent=27 // pred_check
          %p206 = pneg %p102
        $region34: #{tpu_custom_call.1} parent=27 // pred_check_branch
          %208 = sbr.rel (%p206) target = $region36
        $region35: #{tpu_custom_call.1} parent=27 // pred_region
          %210 = dma.done [#allocation10], 3072
        $region36: #{tpu_custom_call.1} parent=27 // pred_fallthru
          _
        %s211 = sand.u32 %s68, 1
        %s212 = scalar_lea.sflag [#allocation7], %s211
        %s213 = sand.u32 %s68, 1
        %s214 = smul.addr %s213, 288
        %s215 = scalar_lea.vmem [#allocation6], %s214
        %p216 = pneg %p81
        %p217 = pneg %p78
        %p218 = pneg %p102
        %p219 = pneg %p99
        %p220 = pneg %p128
        %p221 = pneg %p125
        %s222 = sand.u32 %s115, 1
        %s223 = scalar_lea.sflag [#allocation8], %s222
        %s224 = sand.u32 %s115, 1
        %s225 = smul.addr %s224, 192
        %s226 = scalar_lea.vmem [#allocation11], %s225
        %s227 = sld [smem:[#allocation4 + %s41]]
        %s228 = smul.u32 24, %s40
        %s229 = smul.u32 3, %s42
        %s230 = smul.u32 24, %s40
        %p231 = scmp.eq.s32.totalorder %s41, 0
        %p232 = scmp.eq.s32.totalorder %s42, 0
        %p233 = pnand %p231, %p232
        %p234 = pneg %p233
        // Predicated region
        $region37: #{tpu_custom_call.1} parent=27 // pred_check
          _
        $region38: #{tpu_custom_call.1} parent=27 // pred_check_branch
          %236 = sbr.rel (%p233) target = $region40
        $region39: #{tpu_custom_call.1} parent=27 // pred_region
          %237 = vst [vmem:[#allocation2] sm:$0xff] 0.0
          %238 = vst [vmem:[#allocation2 + $0x8] sm:$0xff] 0.0
          %239 = vst [vmem:[#allocation2 + $0x10] sm:$0xff] 0.0
          %240 = vst [vmem:[#allocation2 + $0x18] sm:$0xff] 0.0
          %241 = vst [vmem:[#allocation2 + $0x20] sm:$0xff] 0.0
          %242 = vst [vmem:[#allocation2 + $0x28] sm:$0xff] 0.0
          %243 = vst [vmem:[#allocation2 + $0x30] sm:$0xff] 0.0
          %244 = vst [vmem:[#allocation2 + $0x38] sm:$0xff] 0.0
          %245 = vst [vmem:[#allocation2 + $0x40] sm:$0xff] 0.0
          %246 = vst [vmem:[#allocation2 + $0x48] sm:$0xff] 0.0
          %247 = vst [vmem:[#allocation2 + $0x50] sm:$0xff] 0.0
          %248 = vst [vmem:[#allocation2 + $0x58] sm:$0xff] 0.0
          %249 = vst [vmem:[#allocation2 + $0x60] sm:$0xff] 0.0
          %250 = vst [vmem:[#allocation2 + $0x68] sm:$0xff] 0.0
          %251 = vst [vmem:[#allocation2 + $0x70] sm:$0xff] 0.0
          %252 = vst [vmem:[#allocation2 + $0x78] sm:$0xff] 0.0
          %253 = vst [vmem:[#allocation2 + $0x80] sm:$0xff] 0.0
          %254 = vst [vmem:[#allocation2 + $0x88] sm:$0xff] 0.0
          %255 = vst [vmem:[#allocation2 + $0x90] sm:$0xff] 0.0
          %256 = vst [vmem:[#allocation2 + $0x98] sm:$0xff] 0.0
          %257 = vst [vmem:[#allocation2 + $0xa0] sm:$0xff] 0.0
          %258 = vst [vmem:[#allocation2 + $0xa8] sm:$0xff] 0.0
          %259 = vst [vmem:[#allocation2 + $0xb0] sm:$0xff] 0.0
          %260 = vst [vmem:[#allocation2 + $0xb8] sm:$0xff] 0.0
        $region40: #{tpu_custom_call.1} parent=27 // pred_fallthru
          _
        %v261 = vld [vmem:[#allocation9] sm:$0xf]
        %v262 = vld [vmem:[#allocation9 + $0x4] sm:$0xf]
        %v263 = vld [vmem:[#allocation9 + $0x8] sm:$0xf]
        %v264 = vld [vmem:[#allocation9 + $0xc] sm:$0xf]
        %v265 = vld [vmem:[#allocation9 + $0x10] sm:$0xf]
        %v266 = vld [vmem:[#allocation9 + $0x14] sm:$0xf]
        %v267 = vld [vmem:[#allocation9 + $0x18] sm:$0xf]
        %v268 = vld [vmem:[#allocation9 + $0x1c] sm:$0xf]
        %v269 = vld [vmem:[#allocation9 + $0x20] sm:$0xf]
        %v270 = vld [vmem:[#allocation9 + $0x24] sm:$0xf]
        %v271 = vld [vmem:[#allocation9 + $0x28] sm:$0xf]
        %v272 = vld [vmem:[#allocation9 + $0x2c] sm:$0xf]
        %v273 = vld [vmem:[#allocation9 + $0x30] sm:$0xf]
        %v274 = vld [vmem:[#allocation9 + $0x34] sm:$0xf]
        %v275 = vld [vmem:[#allocation9 + $0x38] sm:$0xf]
        %v276 = vld [vmem:[#allocation9 + $0x3c] sm:$0xf]
        %v277 = vld [vmem:[#allocation9 + $0x40] sm:$0xf]
        %v278 = vld [vmem:[#allocation9 + $0x44] sm:$0xf]
        %v279 = vld [vmem:[#allocation9 + $0x48] sm:$0xf]
        %v280 = vld [vmem:[#allocation9 + $0x4c] sm:$0xf]
        %v281 = vld [vmem:[#allocation9 + $0x50] sm:$0xf]
        %v282 = vld [vmem:[#allocation9 + $0x54] sm:$0xf]
        %v283 = vld [vmem:[#allocation9 + $0x58] sm:$0xf]
        %v284 = vld [vmem:[#allocation9 + $0x5c] sm:$0xf]
        %v285 = vld [vmem:[#allocation9 + $0x60] sm:$0xf]
        %v286 = vld [vmem:[#allocation9 + $0x64] sm:$0xf]
        %v287 = vld [vmem:[#allocation9 + $0x68] sm:$0xf]
        %v288 = vld [vmem:[#allocation9 + $0x6c] sm:$0xf]
        %v289 = vld [vmem:[#allocation9 + $0x70] sm:$0xf]
        %v290 = vld [vmem:[#allocation9 + $0x74] sm:$0xf]
        %v291 = vld [vmem:[#allocation9 + $0x78] sm:$0xf]
        %v292 = vld [vmem:[#allocation9 + $0x7c] sm:$0xf]
        %v293 = vld [vmem:[#allocation9 + $0x80] sm:$0xf]
        %v294 = vld [vmem:[#allocation9 + $0x84] sm:$0xf]
        %v295 = vld [vmem:[#allocation9 + $0x88] sm:$0xf]
        %v296 = vld [vmem:[#allocation9 + $0x8c] sm:$0xf]
        %v297 = vld [vmem:[#allocation9 + $0x90] sm:$0xf]
        %v298 = vld [vmem:[#allocation9 + $0x94] sm:$0xf]
        %v299 = vld [vmem:[#allocation9 + $0x98] sm:$0xf]
        %v300 = vld [vmem:[#allocation9 + $0x9c] sm:$0xf]
        %v301 = vld [vmem:[#allocation9 + $0xa0] sm:$0xf]
        %v302 = vld [vmem:[#allocation9 + $0xa4] sm:$0xf]
        %v303 = vld [vmem:[#allocation9 + $0xa8] sm:$0xf]
        %v304 = vld [vmem:[#allocation9 + $0xac] sm:$0xf]
        %v305 = vld [vmem:[#allocation9 + $0xb0] sm:$0xf]
        %v306 = vld [vmem:[#allocation9 + $0xb4] sm:$0xf]
        %v307 = vld [vmem:[#allocation9 + $0xb8] sm:$0xf]
        %v308 = vld [vmem:[#allocation9 + $0xbc] sm:$0xf]
        %s309 = sld [smem:[#allocation5 + %s41]]
        %v310 = vld [vmem:[#allocation2] sm:$0xff]
        %v311 = vld [vmem:[#allocation2 + $0x8] sm:$0xff]
        %v312 = vld [vmem:[#allocation2 + $0x10] sm:$0xff]
        %v313 = vld [vmem:[#allocation2 + $0x18] sm:$0xff]
        %v314 = vld [vmem:[#allocation2 + $0x20] sm:$0xff]
        %v315 = vld [vmem:[#allocation2 + $0x28] sm:$0xff]
        %v316 = vld [vmem:[#allocation2 + $0x30] sm:$0xff]
        %v317 = vld [vmem:[#allocation2 + $0x38] sm:$0xff]
        %v318 = vld [vmem:[#allocation2 + $0x40] sm:$0xff]
        %v319 = vld [vmem:[#allocation2 + $0x48] sm:$0xff]
        %v320 = vld [vmem:[#allocation2 + $0x50] sm:$0xff]
        %v321 = vld [vmem:[#allocation2 + $0x58] sm:$0xff]
        %v322 = vld [vmem:[#allocation2 + $0x60] sm:$0xff]
        %v323 = vld [vmem:[#allocation2 + $0x68] sm:$0xff]
        %v324 = vld [vmem:[#allocation2 + $0x70] sm:$0xff]
        %v325 = vld [vmem:[#allocation2 + $0x78] sm:$0xff]
        %v326 = vld [vmem:[#allocation2 + $0x80] sm:$0xff]
        %v327 = vld [vmem:[#allocation2 + $0x88] sm:$0xff]
        %v328 = vld [vmem:[#allocation2 + $0x90] sm:$0xff]
        %v329 = vld [vmem:[#allocation2 + $0x98] sm:$0xff]
        %v330 = vld [vmem:[#allocation2 + $0xa0] sm:$0xff]
        %v331 = vld [vmem:[#allocation2 + $0xa8] sm:$0xff]
        %v332 = vld [vmem:[#allocation2 + $0xb0] sm:$0xff]
        %v333 = vld [vmem:[#allocation2 + $0xb8] sm:$0xff]
        %v334 = vld [vmem:[%s200] sm:$0xff]
        %v335 = vld [vmem:[%s200 + $0x8] sm:$0xf]
        %v336 = vld [vmem:[%s200 + $0xc] sm:$0xff]
        %v337 = vld [vmem:[%s200 + $0x14] sm:$0xf]
        %v338 = vld [vmem:[%s200 + $0x18] sm:$0xff]
        %v339 = vld [vmem:[%s200 + $0x20] sm:$0xf]
        %v340 = vld [vmem:[%s200 + $0x24] sm:$0xff]
        %v341 = vld [vmem:[%s200 + $0x2c] sm:$0xf]
        %v342 = vld [vmem:[%s200 + $0x30] sm:$0xff]
        %v343 = vld [vmem:[%s200 + $0x38] sm:$0xf]
        %v344 = vld [vmem:[%s200 + $0x3c] sm:$0xff]
        %v345 = vld [vmem:[%s200 + $0x44] sm:$0xf]
        %v346 = vld [vmem:[%s200 + $0x48] sm:$0xff]
        %v347 = vld [vmem:[%s200 + $0x50] sm:$0xf]
        %v348 = vld [vmem:[%s200 + $0x54] sm:$0xff]
        %v349 = vld [vmem:[%s200 + $0x5c] sm:$0xf]
        %v350 = vld [vmem:[%s200 + $0x60] sm:$0xff]
        %v351 = vld [vmem:[%s200 + $0x68] sm:$0xf]
        %v352 = vld [vmem:[%s200 + $0x6c] sm:$0xff]
        %v353 = vld [vmem:[%s200 + $0x74] sm:$0xf]
        %v354 = vld [vmem:[%s200 + $0x78] sm:$0xff]
        %v355 = vld [vmem:[%s200 + $0x80] sm:$0xf]
        %v356 = vld [vmem:[%s200 + $0x84] sm:$0xff]
        %v357 = vld [vmem:[%s200 + $0x8c] sm:$0xf]
        %v358 = vld [vmem:[%s200 + $0x90] sm:$0xff]
        %v359 = vld [vmem:[%s200 + $0x98] sm:$0xf]
        %v360 = vld [vmem:[%s200 + $0x9c] sm:$0xff]
        %v361 = vld [vmem:[%s200 + $0xa4] sm:$0xf]
        %v362 = vld [vmem:[%s200 + $0xa8] sm:$0xff]
        %v363 = vld [vmem:[%s200 + $0xb0] sm:$0xf]
        %v364 = vld [vmem:[%s200 + $0xb4] sm:$0xff]
        %v365 = vld [vmem:[%s200 + $0xbc] sm:$0xf]
        %v366 = vld [vmem:[%s200 + $0xc0] sm:$0xff]
        %v367 = vld [vmem:[%s200 + $0xc8] sm:$0xf]
        %v368 = vld [vmem:[%s200 + $0xcc] sm:$0xff]
        %v369 = vld [vmem:[%s200 + $0xd4] sm:$0xf]
        %v370 = vld [vmem:[%s200 + $0xd8] sm:$0xff]
        %v371 = vld [vmem:[%s200 + $0xe0] sm:$0xf]
        %v372 = vld [vmem:[%s200 + $0xe4] sm:$0xff]
        %v373 = vld [vmem:[%s200 + $0xec] sm:$0xf]
        %v374 = vld [vmem:[%s200 + $0xf0] sm:$0xff]
        %v375 = vld [vmem:[%s200 + $0xf8] sm:$0xf]
        %v376 = vld [vmem:[%s200 + $0xfc] sm:$0xff]
        %v377 = vld [vmem:[%s200 + $0x104] sm:$0xf]
        %v378 = vld [vmem:[%s200 + $0x108] sm:$0xff]
        %v379 = vld [vmem:[%s200 + $0x110] sm:$0xf]
        %v380 = vld [vmem:[%s200 + $0x114] sm:$0xff]
        %v381 = vld [vmem:[%s200 + $0x11c] sm:$0xf]
        %v430 = vunpack.c.l.b16 %v334
        %v431 = vunpack.c.h.b16 %v334
        %v432 = vunpack.c.l.b16 %v335
        %v433 = vunpack.c.l.b16 %v336
        %v434 = vunpack.c.h.b16 %v336
        %v435 = vunpack.c.l.b16 %v337
        %v436 = vunpack.c.l.b16 %v338
        %v437 = vunpack.c.h.b16 %v338
        %v438 = vunpack.c.l.b16 %v339
        %v439 = vunpack.c.l.b16 %v340
        %v440 = vunpack.c.h.b16 %v340
        %v441 = vunpack.c.l.b16 %v341
        %v442 = vunpack.c.l.b16 %v342
        %v443 = vunpack.c.h.b16 %v342
        %v444 = vunpack.c.l.b16 %v343
        %v445 = vunpack.c.l.b16 %v344
        %v446 = vunpack.c.h.b16 %v344
        %v447 = vunpack.c.l.b16 %v345
        %v448 = vunpack.c.l.b16 %v346
        %v449 = vunpack.c.h.b16 %v346
        %v450 = vunpack.c.l.b16 %v347
        %v451 = vunpack.c.l.b16 %v348
        %v452 = vunpack.c.h.b16 %v348
        %v453 = vunpack.c.l.b16 %v349
        %v454 = vunpack.c.l.b16 %v350
        %v455 = vunpack.c.h.b16 %v350
        %v456 = vunpack.c.l.b16 %v351
        %v457 = vunpack.c.l.b16 %v352
        %v458 = vunpack.c.h.b16 %v352
        %v459 = vunpack.c.l.b16 %v353
        %v460 = vunpack.c.l.b16 %v354
        %v461 = vunpack.c.h.b16 %v354
        %v462 = vunpack.c.l.b16 %v355
        %v463 = vunpack.c.l.b16 %v356
        %v464 = vunpack.c.h.b16 %v356
        %v465 = vunpack.c.l.b16 %v357
        %v466 = vunpack.c.l.b16 %v358
        %v467 = vunpack.c.h.b16 %v358
        %v468 = vunpack.c.l.b16 %v359
        %v469 = vunpack.c.l.b16 %v360
        %v470 = vunpack.c.h.b16 %v360
        %v471 = vunpack.c.l.b16 %v361
        %v472 = vunpack.c.l.b16 %v362
        %v473 = vunpack.c.h.b16 %v362
        %v474 = vunpack.c.l.b16 %v363
        %v475 = vunpack.c.l.b16 %v364
        %v476 = vunpack.c.h.b16 %v364
        %v477 = vunpack.c.l.b16 %v365
        %v478 = vunpack.c.l.b16 %v366
        %v479 = vunpack.c.h.b16 %v366
        %v480 = vunpack.c.l.b16 %v367
        %v481 = vunpack.c.l.b16 %v368
        %v482 = vunpack.c.h.b16 %v368
        %v483 = vunpack.c.l.b16 %v369
        %v484 = vunpack.c.l.b16 %v370
        %v485 = vunpack.c.h.b16 %v370
        %v486 = vunpack.c.l.b16 %v371
        %v487 = vunpack.c.l.b16 %v372
        %v488 = vunpack.c.h.b16 %v372
        %v489 = vunpack.c.l.b16 %v373
        %v490 = vunpack.c.l.b16 %v374
        %v491 = vunpack.c.h.b16 %v374
        %v492 = vunpack.c.l.b16 %v375
        %v493 = vunpack.c.l.b16 %v376
        %v494 = vunpack.c.h.b16 %v376
        %v495 = vunpack.c.l.b16 %v377
        %v496 = vunpack.c.l.b16 %v378
        %v497 = vunpack.c.h.b16 %v378
        %v498 = vunpack.c.l.b16 %v379
        %v499 = vunpack.c.l.b16 %v380
        %v500 = vunpack.c.h.b16 %v380
        %v501 = vunpack.c.l.b16 %v381
        %v502 = vpack.c.b16 %v433, %v430
        %v503 = vpack.c.b16 %v434, %v431
        %v504 = vpack.c.b16 %v435, %v432
        %v505 = vpack.c.b16 %v439, %v436
        %v506 = vpack.c.b16 %v440, %v437
        %v507 = vpack.c.b16 %v441, %v438
        %v508 = vpack.c.b16 %v445, %v442
        %v509 = vpack.c.b16 %v446, %v443
        %v510 = vpack.c.b16 %v447, %v444
        %v511 = vpack.c.b16 %v451, %v448
        %v512 = vpack.c.b16 %v452, %v449
        %v513 = vpack.c.b16 %v453, %v450
        %v514 = vpack.c.b16 %v457, %v454
        %v515 = vpack.c.b16 %v458, %v455
        %v516 = vpack.c.b16 %v459, %v456
        %v517 = vpack.c.b16 %v463, %v460
        %v518 = vpack.c.b16 %v464, %v461
        %v519 = vpack.c.b16 %v465, %v462
        %v520 = vpack.c.b16 %v469, %v466
        %v521 = vpack.c.b16 %v470, %v467
        %v522 = vpack.c.b16 %v471, %v468
        %v523 = vpack.c.b16 %v475, %v472
        %v524 = vpack.c.b16 %v476, %v473
        %v525 = vpack.c.b16 %v477, %v474
        %v526 = vpack.c.b16 %v481, %v478
        %v527 = vpack.c.b16 %v482, %v479
        %v528 = vpack.c.b16 %v483, %v480
        %v529 = vpack.c.b16 %v487, %v484
        %v530 = vpack.c.b16 %v488, %v485
        %v531 = vpack.c.b16 %v489, %v486
        %v532 = vpack.c.b16 %v493, %v490
        %v533 = vpack.c.b16 %v494, %v491
        %v534 = vpack.c.b16 %v495, %v492
        %v535 = vpack.c.b16 %v499, %v496
        %v536 = vpack.c.b16 %v500, %v497
        %v537 = vpack.c.b16 %v501, %v498
        %v622 = vunpack.c.l.b16 %v261
        %v623 = vunpack.c.l.b16 %v262
        %v624 = vunpack.c.l.b16 %v263
        %v625 = vunpack.c.l.b16 %v264
        %v626 = vunpack.c.l.b16 %v265
        %v627 = vunpack.c.l.b16 %v266
        %v628 = vunpack.c.l.b16 %v267
        %v629 = vunpack.c.l.b16 %v268
        %v630 = vunpack.c.l.b16 %v269
        %v631 = vunpack.c.l.b16 %v270
        %v632 = vunpack.c.l.b16 %v271
        %v633 = vunpack.c.l.b16 %v272
        %v634 = vunpack.c.l.b16 %v273
        %v635 = vunpack.c.l.b16 %v274
        %v636 = vunpack.c.l.b16 %v275
        %v637 = vunpack.c.l.b16 %v276
        %v638 = vunpack.c.l.b16 %v277
        %v639 = vunpack.c.l.b16 %v278
        %v640 = vunpack.c.l.b16 %v279
        %v641 = vunpack.c.l.b16 %v280
        %v642 = vunpack.c.l.b16 %v281
        %v643 = vunpack.c.l.b16 %v282
        %v644 = vunpack.c.l.b16 %v283
        %v645 = vunpack.c.l.b16 %v284
        %v646 = vunpack.c.l.b16 %v285
        %v647 = vunpack.c.l.b16 %v286
        %v648 = vunpack.c.l.b16 %v287
        %v649 = vunpack.c.l.b16 %v288
        %v650 = vunpack.c.l.b16 %v289
        %v651 = vunpack.c.l.b16 %v290
        %v652 = vunpack.c.l.b16 %v291
        %v653 = vunpack.c.l.b16 %v292
        %v654 = vunpack.c.l.b16 %v293
        %v655 = vunpack.c.l.b16 %v294
        %v656 = vunpack.c.l.b16 %v295
        %v657 = vunpack.c.l.b16 %v296
        %v658 = vunpack.c.l.b16 %v297
        %v659 = vunpack.c.l.b16 %v298
        %v660 = vunpack.c.l.b16 %v299
        %v661 = vunpack.c.l.b16 %v300
        %v662 = vunpack.c.l.b16 %v301
        %v663 = vunpack.c.l.b16 %v302
        %v664 = vunpack.c.l.b16 %v303
        %v665 = vunpack.c.l.b16 %v304
        %v666 = vunpack.c.l.b16 %v305
        %v667 = vunpack.c.l.b16 %v306
        %v668 = vunpack.c.l.b16 %v307
        %v669 = vunpack.c.l.b16 %v308
        %v670 = vpack.c.b16 %v623, %v622
        %v671 = vpack.c.b16 %v625, %v624
        %v672 = vpack.c.b16 %v627, %v626
        %v673 = vpack.c.b16 %v629, %v628
        %v674 = vpack.c.b16 %v631, %v630
        %v675 = vpack.c.b16 %v633, %v632
        %v676 = vpack.c.b16 %v635, %v634
        %v677 = vpack.c.b16 %v637, %v636
        %v678 = vpack.c.b16 %v639, %v638
        %v679 = vpack.c.b16 %v641, %v640
        %v680 = vpack.c.b16 %v643, %v642
        %v681 = vpack.c.b16 %v645, %v644
        %v682 = vpack.c.b16 %v647, %v646
        %v683 = vpack.c.b16 %v649, %v648
        %v684 = vpack.c.b16 %v651, %v650
        %v685 = vpack.c.b16 %v653, %v652
        %v686 = vpack.c.b16 %v655, %v654
        %v687 = vpack.c.b16 %v657, %v656
        %v688 = vpack.c.b16 %v659, %v658
        %v689 = vpack.c.b16 %v661, %v660
        %v690 = vpack.c.b16 %v663, %v662
        %v691 = vpack.c.b16 %v665, %v664
        %v692 = vpack.c.b16 %v667, %v666
        %v693 = vpack.c.b16 %v669, %v668
        %718 = vmatpush.bf16.msra.mxu0 %v677
        %719 = vmatpush.bf16.msra.mxu0 %v676
        %720 = vmatpush.bf16.msra.mxu0 %v675
        %721 = vmatpush.bf16.msra.mxu0 %v674
        %722 = vmatpush.bf16.msra.mxu0 %v673
        %723 = vmatpush.bf16.msra.mxu0 %v672
        %724 = vmatpush.bf16.msra.mxu0 %v671
        %725 = vmatpush.bf16.msra.mxu0 %v670
        %726 = vmatmul.bf16.gmra.mxu0 %v502
        %v727 = vpop.f32.mrf.mxu0
        %v728 = vadd.f32 0.0, %v727
        %v729 = vpop.f32.mrf.mxu0
        %v730 = vadd.f32 0.0, %v729
        %731 = vmatmul.bf16.gmra.mxu0 %v505
        %v732 = vpop.f32.mrf.mxu0
        %v733 = vadd.f32 0.0, %v732
        %v734 = vpop.f32.mrf.mxu0
        %v735 = vadd.f32 0.0, %v734
        %736 = vmatmul.bf16.gmra.mxu0 %v508
        %v737 = vpop.f32.mrf.mxu0
        %v738 = vadd.f32 0.0, %v737
        %v739 = vpop.f32.mrf.mxu0
        %v740 = vadd.f32 0.0, %v739
        %741 = vmatmul.bf16.gmra.mxu0 %v511
        %v742 = vpop.f32.mrf.mxu0
        %v743 = vadd.f32 0.0, %v742
        %v744 = vpop.f32.mrf.mxu0
        %v745 = vadd.f32 0.0, %v744
        %746 = vmatmul.bf16.gmra.mxu0 %v514
        %v747 = vpop.f32.mrf.mxu0
        %v748 = vadd.f32 0.0, %v747
        %v749 = vpop.f32.mrf.mxu0
        %v750 = vadd.f32 0.0, %v749
        %751 = vmatmul.bf16.gmra.mxu0 %v517
        %v752 = vpop.f32.mrf.mxu0
        %v753 = vadd.f32 0.0, %v752
        %v754 = vpop.f32.mrf.mxu0
        %v755 = vadd.f32 0.0, %v754
        %756 = vmatmul.bf16.gmra.mxu0 %v520
        %v757 = vpop.f32.mrf.mxu0
        %v758 = vadd.f32 0.0, %v757
        %v759 = vpop.f32.mrf.mxu0
        %v760 = vadd.f32 0.0, %v759
        %761 = vmatmul.bf16.gmra.mxu0 %v523
        %v762 = vpop.f32.mrf.mxu0
        %v763 = vadd.f32 0.0, %v762
        %v764 = vpop.f32.mrf.mxu0
        %v765 = vadd.f32 0.0, %v764
        %766 = vmatmul.bf16.gmra.mxu0 %v526
        %v767 = vpop.f32.mrf.mxu0
        %v768 = vadd.f32 0.0, %v767
        %v769 = vpop.f32.mrf.mxu0
        %v770 = vadd.f32 0.0, %v769
        %771 = vmatmul.bf16.gmra.mxu0 %v529
        %v772 = vpop.f32.mrf.mxu0
        %v773 = vadd.f32 0.0, %v772
        %v774 = vpop.f32.mrf.mxu0
        %v775 = vadd.f32 0.0, %v774
        %776 = vmatmul.bf16.gmra.mxu0 %v532
        %v777 = vpop.f32.mrf.mxu0
        %v778 = vadd.f32 0.0, %v777
        %v779 = vpop.f32.mrf.mxu0
        %v780 = vadd.f32 0.0, %v779
        %781 = vmatmul.bf16.gmra.mxu0 %v535
        %v782 = vpop.f32.mrf.mxu0
        %v783 = vadd.f32 0.0, %v782
        %v784 = vpop.f32.mrf.mxu0
        %v785 = vadd.f32 0.0, %v784
        %786 = vdwg.mxu0
        %787 = vmatpush.bf16.msra.mxu0 %v685
        %788 = vmatpush.bf16.msra.mxu0 %v684
        %789 = vmatpush.bf16.msra.mxu0 %v683
        %790 = vmatpush.bf16.msra.mxu0 %v682
        %791 = vmatpush.bf16.msra.mxu0 %v681
        %792 = vmatpush.bf16.msra.mxu0 %v680
        %793 = vmatpush.bf16.msra.mxu0 %v679
        %794 = vmatpush.bf16.msra.mxu0 %v678
        %795 = vmatmul.bf16.gmra.mxu0 %v503
        %v796 = vpop.f32.mrf.mxu0
        %v797 = vadd.f32 %v728, %v796
        %v798 = vpop.f32.mrf.mxu0
        %v799 = vadd.f32 %v730, %v798
        %800 = vmatmul.bf16.gmra.mxu0 %v506
        %v801 = vpop.f32.mrf.mxu0
        %v802 = vadd.f32 %v733, %v801
        %v803 = vpop.f32.mrf.mxu0
        %v804 = vadd.f32 %v735, %v803
        %805 = vmatmul.bf16.gmra.mxu0 %v509
        %v806 = vpop.f32.mrf.mxu0
        %v807 = vadd.f32 %v738, %v806
        %v808 = vpop.f32.mrf.mxu0
        %v809 = vadd.f32 %v740, %v808
        %810 = vmatmul.bf16.gmra.mxu0 %v512
        %v811 = vpop.f32.mrf.mxu0
        %v812 = vadd.f32 %v743, %v811
        %v813 = vpop.f32.mrf.mxu0
        %v814 = vadd.f32 %v745, %v813
        %815 = vmatmul.bf16.gmra.mxu0 %v515
        %v816 = vpop.f32.mrf.mxu0
        %v817 = vadd.f32 %v748, %v816
        %v818 = vpop.f32.mrf.mxu0
        %v819 = vadd.f32 %v750, %v818
        %820 = vmatmul.bf16.gmra.mxu0 %v518
        %v821 = vpop.f32.mrf.mxu0
        %v822 = vadd.f32 %v753, %v821
        %v823 = vpop.f32.mrf.mxu0
        %v824 = vadd.f32 %v755, %v823
        %825 = vmatmul.bf16.gmra.mxu0 %v521
        %v826 = vpop.f32.mrf.mxu0
        %v827 = vadd.f32 %v758, %v826
        %v828 = vpop.f32.mrf.mxu0
        %v829 = vadd.f32 %v760, %v828
        %830 = vmatmul.bf16.gmra.mxu0 %v524
        %v831 = vpop.f32.mrf.mxu0
        %v832 = vadd.f32 %v763, %v831
        %v833 = vpop.f32.mrf.mxu0
        %v834 = vadd.f32 %v765, %v833
        %835 = vmatmul.bf16.gmra.mxu0 %v527
        %v836 = vpop.f32.mrf.mxu0
        %v837 = vadd.f32 %v768, %v836
        %v838 = vpop.f32.mrf.mxu0
        %v839 = vadd.f32 %v770, %v838
        %840 = vmatmul.bf16.gmra.mxu0 %v530
        %v841 = vpop.f32.mrf.mxu0
        %v842 = vadd.f32 %v773, %v841
        %v843 = vpop.f32.mrf.mxu0
        %v844 = vadd.f32 %v775, %v843
        %845 = vmatmul.bf16.gmra.mxu0 %v533
        %v846 = vpop.f32.mrf.mxu0
        %v847 = vadd.f32 %v778, %v846
        %v848 = vpop.f32.mrf.mxu0
        %v849 = vadd.f32 %v780, %v848
        %850 = vmatmul.bf16.gmra.mxu0 %v536
        %v851 = vpop.f32.mrf.mxu0
        %v852 = vadd.f32 %v783, %v851
        %v853 = vpop.f32.mrf.mxu0
        %v854 = vadd.f32 %v785, %v853
        %855 = vdwg.mxu0
        %856 = vmatpush.bf16.msra.mxu0 %v693
        %857 = vmatpush.bf16.msra.mxu0 %v692
        %858 = vmatpush.bf16.msra.mxu0 %v691
        %859 = vmatpush.bf16.msra.mxu0 %v690
        %860 = vmatpush.bf16.msra.mxu0 %v689
        %861 = vmatpush.bf16.msra.mxu0 %v688
        %862 = vmatpush.bf16.msra.mxu0 %v687
        %863 = vmatpush.bf16.msra.mxu0 %v686
        %864 = vmatmul.bf16.gmra.mxu0 %v504
        %v865 = vpop.f32.mrf.mxu0
        %v866 = vadd.f32 %v797, %v865
        %v867 = vpop.f32.mrf.mxu0
        %v868 = vadd.f32 %v799, %v867
        %869 = vmatmul.bf16.gmra.mxu0 %v507
        %v870 = vpop.f32.mrf.mxu0
        %v871 = vadd.f32 %v802, %v870
        %v872 = vpop.f32.mrf.mxu0
        %v873 = vadd.f32 %v804, %v872
        %874 = vmatmul.bf16.gmra.mxu0 %v510
        %v875 = vpop.f32.mrf.mxu0
        %v876 = vadd.f32 %v807, %v875
        %v877 = vpop.f32.mrf.mxu0
        %v878 = vadd.f32 %v809, %v877
        %879 = vmatmul.bf16.gmra.mxu0 %v513
        %v880 = vpop.f32.mrf.mxu0
        %v881 = vadd.f32 %v812, %v880
        %v882 = vpop.f32.mrf.mxu0
        %v883 = vadd.f32 %v814, %v882
        %884 = vmatmul.bf16.gmra.mxu0 %v516
        %v885 = vpop.f32.mrf.mxu0
        %v886 = vadd.f32 %v817, %v885
        %v887 = vpop.f32.mrf.mxu0
        %v888 = vadd.f32 %v819, %v887
        %889 = vmatmul.bf16.gmra.mxu0 %v519
        %v890 = vpop.f32.mrf.mxu0
        %v891 = vadd.f32 %v822, %v890
        %v892 = vpop.f32.mrf.mxu0
        %v893 = vadd.f32 %v824, %v892
        %894 = vmatmul.bf16.gmra.mxu0 %v522
        %v895 = vpop.f32.mrf.mxu0
        %v896 = vadd.f32 %v827, %v895
        %v897 = vpop.f32.mrf.mxu0
        %v898 = vadd.f32 %v829, %v897
        %899 = vmatmul.bf16.gmra.mxu0 %v525
        %v900 = vpop.f32.mrf.mxu0
        %v901 = vadd.f32 %v832, %v900
        %v902 = vpop.f32.mrf.mxu0
        %v903 = vadd.f32 %v834, %v902
        %904 = vmatmul.bf16.gmra.mxu0 %v528
        %v905 = vpop.f32.mrf.mxu0
        %v906 = vadd.f32 %v837, %v905
        %v907 = vpop.f32.mrf.mxu0
        %v908 = vadd.f32 %v839, %v907
        %909 = vmatmul.bf16.gmra.mxu0 %v531
        %v910 = vpop.f32.mrf.mxu0
        %v911 = vadd.f32 %v842, %v910
        %v912 = vpop.f32.mrf.mxu0
        %v913 = vadd.f32 %v844, %v912
        %914 = vmatmul.bf16.gmra.mxu0 %v534
        %v915 = vpop.f32.mrf.mxu0
        %v916 = vadd.f32 %v847, %v915
        %v917 = vpop.f32.mrf.mxu0
        %v918 = vadd.f32 %v849, %v917
        %919 = vmatmul.bf16.gmra.mxu0 %v537
        %v920 = vpop.f32.mrf.mxu0
        %v921 = vadd.f32 %v852, %v920
        %v922 = vpop.f32.mrf.mxu0
        %v923 = vadd.f32 %v854, %v922
        %924 = vdwg.mxu0
        %v925 = vstv %s309
        %v926 = vmul.f32 %v925, %v866
        %v927 = vmul.f32 %v925, %v868
        %v928 = vmul.f32 %v925, %v871
        %v929 = vmul.f32 %v925, %v873
        %v930 = vmul.f32 %v925, %v876
        %v931 = vmul.f32 %v925, %v878
        %v932 = vmul.f32 %v925, %v881
        %v933 = vmul.f32 %v925, %v883
        %v934 = vmul.f32 %v925, %v886
        %v935 = vmul.f32 %v925, %v888
        %v936 = vmul.f32 %v925, %v891
        %v937 = vmul.f32 %v925, %v893
        %v938 = vmul.f32 %v925, %v896
        %v939 = vmul.f32 %v925, %v898
        %v940 = vmul.f32 %v925, %v901
        %v941 = vmul.f32 %v925, %v903
        %v942 = vmul.f32 %v925, %v906
        %v943 = vmul.f32 %v925, %v908
        %v944 = vmul.f32 %v925, %v911
        %v945 = vmul.f32 %v925, %v913
        %v946 = vmul.f32 %v925, %v916
        %v947 = vmul.f32 %v925, %v918
        %v948 = vmul.f32 %v925, %v921
        %v949 = vmul.f32 %v925, %v923
        %v950 = vadd.f32 %v310, %v926
        %v951 = vadd.f32 %v311, %v927
        %v952 = vadd.f32 %v312, %v928
        %v953 = vadd.f32 %v313, %v929
        %v954 = vadd.f32 %v314, %v930
        %v955 = vadd.f32 %v315, %v931
        %v956 = vadd.f32 %v316, %v932
        %v957 = vadd.f32 %v317, %v933
        %v958 = vadd.f32 %v318, %v934
        %v959 = vadd.f32 %v319, %v935
        %v960 = vadd.f32 %v320, %v936
        %v961 = vadd.f32 %v321, %v937
        %v962 = vadd.f32 %v322, %v938
        %v963 = vadd.f32 %v323, %v939
        %v964 = vadd.f32 %v324, %v940
        %v965 = vadd.f32 %v325, %v941
        %v966 = vadd.f32 %v326, %v942
        %v967 = vadd.f32 %v327, %v943
        %v968 = vadd.f32 %v328, %v944
        %v969 = vadd.f32 %v329, %v945
        %v970 = vadd.f32 %v330, %v946
        %v971 = vadd.f32 %v331, %v947
        %v972 = vadd.f32 %v332, %v948
        %v973 = vadd.f32 %v333, %v949
        %974 = vst [vmem:[#allocation2] sm:$0xff] %v950
        %975 = vst [vmem:[#allocation2 + $0x8] sm:$0xff] %v951
        %976 = vst [vmem:[#allocation2 + $0x10] sm:$0xff] %v952
        %977 = vst [vmem:[#allocation2 + $0x18] sm:$0xff] %v953
        %978 = vst [vmem:[#allocation2 + $0x20] sm:$0xff] %v954
        %979 = vst [vmem:[#allocation2 + $0x28] sm:$0xff] %v955
        %980 = vst [vmem:[#allocation2 + $0x30] sm:$0xff] %v956
        %981 = vst [vmem:[#allocation2 + $0x38] sm:$0xff] %v957
        %982 = vst [vmem:[#allocation2 + $0x40] sm:$0xff] %v958
        %983 = vst [vmem:[#allocation2 + $0x48] sm:$0xff] %v959
        %984 = vst [vmem:[#allocation2 + $0x50] sm:$0xff] %v960
        %985 = vst [vmem:[#allocation2 + $0x58] sm:$0xff] %v961
        %986 = vst [vmem:[#allocation2 + $0x60] sm:$0xff] %v962
        %987 = vst [vmem:[#allocation2 + $0x68] sm:$0xff] %v963
        %988 = vst [vmem:[#allocation2 + $0x70] sm:$0xff] %v964
        %989 = vst [vmem:[#allocation2 + $0x78] sm:$0xff] %v965
        %990 = vst [vmem:[#allocation2 + $0x80] sm:$0xff] %v966
        %991 = vst [vmem:[#allocation2 + $0x88] sm:$0xff] %v967
        %992 = vst [vmem:[#allocation2 + $0x90] sm:$0xff] %v968
        %993 = vst [vmem:[#allocation2 + $0x98] sm:$0xff] %v969
        %994 = vst [vmem:[#allocation2 + $0xa0] sm:$0xff] %v970
        %995 = vst [vmem:[#allocation2 + $0xa8] sm:$0xff] %v971
        %996 = vst [vmem:[#allocation2 + $0xb0] sm:$0xff] %v972
        %997 = vst [vmem:[#allocation2 + $0xb8] sm:$0xff] %v973
        %p998 = scmp.eq.s32.totalorder %s41, 1
        %p999 = pnand %p998, %p232
        %p1000 = pneg %p999
        // Predicated region
        $region41: #{tpu_custom_call.1} parent=27 // pred_check
          _
        $region42: #{tpu_custom_call.1} parent=27 // pred_check_branch
          %1002 = sbr.rel (%p999) target = $region44
        $region43: #{tpu_custom_call.1} parent=27 // pred_region
          %v1003 = vld [vmem:[#allocation2] sm:$0xff]
          %v1004 = vld [vmem:[#allocation2 + $0x8] sm:$0xff]
          %v1005 = vld [vmem:[#allocation2 + $0x10] sm:$0xff]
          %v1006 = vld [vmem:[#allocation2 + $0x18] sm:$0xff]
          %v1007 = vld [vmem:[#allocation2 + $0x20] sm:$0xff]
          %v1008 = vld [vmem:[#allocation2 + $0x28] sm:$0xff]
          %v1009 = vld [vmem:[#allocation2 + $0x30] sm:$0xff]
          %v1010 = vld [vmem:[#allocation2 + $0x38] sm:$0xff]
          %v1011 = vld [vmem:[#allocation2 + $0x40] sm:$0xff]
          %v1012 = vld [vmem:[#allocation2 + $0x48] sm:$0xff]
          %v1013 = vld [vmem:[#allocation2 + $0x50] sm:$0xff]
          %v1014 = vld [vmem:[#allocation2 + $0x58] sm:$0xff]
          %v1015 = vld [vmem:[#allocation2 + $0x60] sm:$0xff]
          %v1016 = vld [vmem:[#allocation2 + $0x68] sm:$0xff]
          %v1017 = vld [vmem:[#allocation2 + $0x70] sm:$0xff]
          %v1018 = vld [vmem:[#allocation2 + $0x78] sm:$0xff]
          %v1019 = vld [vmem:[#allocation2 + $0x80] sm:$0xff]
          %v1020 = vld [vmem:[#allocation2 + $0x88] sm:$0xff]
          %v1021 = vld [vmem:[#allocation2 + $0x90] sm:$0xff]
          %v1022 = vld [vmem:[#allocation2 + $0x98] sm:$0xff]
          %v1023 = vld [vmem:[#allocation2 + $0xa0] sm:$0xff]
          %v1024 = vld [vmem:[#allocation2 + $0xa8] sm:$0xff]
          %v1025 = vld [vmem:[#allocation2 + $0xb0] sm:$0xff]
          %v1026 = vld [vmem:[#allocation2 + $0xb8] sm:$0xff]
          %1027 = vst [vmem:[%s226] sm:$0xff] %v1003
          %1028 = vst [vmem:[%s226 + $0x8] sm:$0xff] %v1004
          %1029 = vst [vmem:[%s226 + $0x10] sm:$0xff] %v1005
          %1030 = vst [vmem:[%s226 + $0x18] sm:$0xff] %v1006
          %1031 = vst [vmem:[%s226 + $0x20] sm:$0xff] %v1007
          %1032 = vst [vmem:[%s226 + $0x28] sm:$0xff] %v1008
          %1033 = vst [vmem:[%s226 + $0x30] sm:$0xff] %v1009
          %1034 = vst [vmem:[%s226 + $0x38] sm:$0xff] %v1010
          %1035 = vst [vmem:[%s226 + $0x40] sm:$0xff] %v1011
          %1036 = vst [vmem:[%s226 + $0x48] sm:$0xff] %v1012
          %1037 = vst [vmem:[%s226 + $0x50] sm:$0xff] %v1013
          %1038 = vst [vmem:[%s226 + $0x58] sm:$0xff] %v1014
          %1039 = vst [vmem:[%s226 + $0x60] sm:$0xff] %v1015
          %1040 = vst [vmem:[%s226 + $0x68] sm:$0xff] %v1016
          %1041 = vst [vmem:[%s226 + $0x70] sm:$0xff] %v1017
          %1042 = vst [vmem:[%s226 + $0x78] sm:$0xff] %v1018
          %1043 = vst [vmem:[%s226 + $0x80] sm:$0xff] %v1019
          %1044 = vst [vmem:[%s226 + $0x88] sm:$0xff] %v1020
          %1045 = vst [vmem:[%s226 + $0x90] sm:$0xff] %v1021
          %1046 = vst [vmem:[%s226 + $0x98] sm:$0xff] %v1022
          %1047 = vst [vmem:[%s226 + $0xa0] sm:$0xff] %v1023
          %1048 = vst [vmem:[%s226 + $0xa8] sm:$0xff] %v1024
          %1049 = vst [vmem:[%s226 + $0xb0] sm:$0xff] %v1025
          %1050 = vst [vmem:[%s226 + $0xb8] sm:$0xff] %v1026
        $region44: #{tpu_custom_call.1} parent=27 // pred_fallthru
          _
        %s1051 = sand.u32 %s115, 1
        %s1052 = scalar_lea.sflag [#allocation8], %s1051
        %s1053 = sand.u32 %s115, 1
        %s1054 = smul.addr %s1053, 192
        %s1055 = scalar_lea.vmem [#allocation11], %s1054
        // Predicated region
        $region45: #{tpu_custom_call.1} parent=27 // pred_check
          %p1056 = pneg %p125
        $region46: #{tpu_custom_call.1} parent=27 // pred_check_branch
          %1058 = sbr.rel (%p1056) target = $region48
        $region47: #{tpu_custom_call.1} parent=27 // pred_region
          %s1059 = smul.u32 24, %s40
          %1061 = vsyncadd %s1052, 0
          %s1062 = smul.addr %s1059, 8
          %s1063 = scalar_lea.hbm %s4, %s1062
          %s1064 = sshll.u32 %s1055, 4
          %s1065 = int_to_ptr.vmem [resolvable:$true] %s1064
          %s1066 = sshll.u32 %s1063, 4
          %s1067 = int_to_ptr.hbm [resolvable:$true] %s1066
          %1072 = dma.vmem_to_hbm [thread:$0]  %s1065, 3072, %s1067, %s1052, 128, 128, 8
        $region48: #{tpu_custom_call.1} parent=27 // pred_fallthru
          _
      $region28: #{tpu_custom_call.1} parent=5 // pred_fallthru
        _
      %p1073 = scmp.le.s32.totalorder 2, %s30
      // Predicated region
      $region49: #{tpu_custom_call.1} parent=5 // pred_check
        %p1074 = pneg %p1073
      $region50: #{tpu_custom_call.1} parent=5 // pred_check_branch
        %1076 = sbr.rel (%p1074) target = $region52
      $region51: #{tpu_custom_call.1} parent=5 // pred_region
        %s1077 = ssub.s32 %s30, 2
        // Predicated region
        $region53: #{tpu_custom_call.1} parent=51 // pred_check
          %p1078 = pneg %p131
        $region54: #{tpu_custom_call.1} parent=51 // pred_check_branch
          %1080 = sbr.rel (%p1078) target = $region56
        $region55: #{tpu_custom_call.1} parent=51 // pred_region
          %s1081 = sand.u32 %s116, 1
          %s1082 = scalar_lea.sflag [#allocation8], %s1081
          %s1083 = sand.u32 %s116, 1
          %s1084 = smul.addr %s1083, 192
          %s1085 = scalar_lea.vmem [#allocation11], %s1084
          %1087 = dma.done %s1082, 3072
        $region56: #{tpu_custom_call.1} parent=51 // pred_fallthru
          _
      $region52: #{tpu_custom_call.1} parent=5 // pred_fallthru
        _
    $region6: #{tpu_custom_call.1} parent=1 // loop_footer
      %s34 = sadd.s32 1, %s30
    $region7: #{tpu_custom_call.1} parent=1 // loop_footer_branch
      %29 = sbr.rel target = $region3
    $region8: #{tpu_custom_call.1} parent=1 // loop_exit
      _
    %1088 = vsyncpa [#allocation7], 1
    %s1089 = scalar_lea.sflag [#allocation7], 1
    %1090 = vsyncpa %s1089, 1
    %1091 = vsyncpa [#allocation10], 1
    %1092 = vsyncpa [#allocation8], 1
    %s1093 = scalar_lea.sflag [#allocation8], 1
    %1094 = vsyncpa %s1093, 1

</llo_original>
